<compile_context>
chip_gen: v6e
topology: v6e:2x2x1
jax: 0.10.0
libtpu: 0.0.40
codegen_flags: <defaults>
</compile_context>

<pallas_src>
import functools

import numpy as np
import jax
import jax.numpy as jnp
from jax.experimental import pallas as pl
from jax.experimental.pallas import tpu as pltpu


# ------------------------------ Pallas kernel -------------------------------

def fused_encoder_kernel(cols_ref, w_ref, b_ref, p2_ref, o_ref):
    """Fused per-grid-step stage:
         conv3x3/s2 as ONE im2col matmul (bf16 MXU operands, f32 accumulation)
         + bias + ReLU (f32 VPU)
         + adaptive avg pool as p2 @ feat (f32 MXU)  ->  [Bt, S2p, Cout]."""
    Bt, HoWo, Kp = cols_ref.shape                         # static block shape

    # Single K=Kp matmul over all Bt images: M = Bt*HoWo (tile-aligned leading-dim merge).
    cols = cols_ref[...].reshape(Bt * HoWo, Kp)           # bf16 [Bt*HoWo, Kp]
    conv = jnp.dot(cols, w_ref[...],
                   preferred_element_type=jnp.float32)    # f32 [Bt*HoWo, Cout]
    feat = jnp.maximum(conv + b_ref[...], 0.0)            # bias + ReLU in f32

    # Adaptive avg pool + permute + view as a small f32 matmul per image
    # (pool matrix kept f32 for exact window weights).
    p2 = p2_ref[...]                                      # f32 [S2p, HoWo]
    for bi in range(Bt):                                  # static, small
        fb = feat[bi * HoWo:(bi + 1) * HoWo, :]           # [HoWo, Cout], tile-aligned slice
        o_ref[bi] = jnp.dot(p2, fb,
                            preferred_element_type=jnp.float32).astype(o_ref.dtype)


# ------------------------------ host-side glue ------------------------------

def _pool_matrix_np(in_size, out_size):
    """Averaging matrix [out_size, in_size] matching nn.AdaptiveAvgPool2d."""
    P = np.zeros((out_size, in_size), np.float32)
    for i in range(out_size):
        start = (i * in_size) // out_size
        end = -(-((i + 1) * in_size) // out_size)  # ceil
        P[i, start:end] = 1.0 / (end - start)
    return P


def make_pool_matrix_padded(Ho, Wo, out_size, row_multiple=8):
    """kron(P_h, P_w): [S*S, Ho*Wo], rows zero-padded up to a multiple of 8
    (full-sublane output stores). Host numpy constant, built once."""
    P = np.kron(_pool_matrix_np(Ho, out_size), _pool_matrix_np(Wo, out_size))
    S2 = P.shape[0]
    S2p = -(-S2 // row_multiple) * row_multiple
    Pp = np.zeros((S2p, P.shape[1]), np.float32)
    Pp[:S2] = P
    return Pp


@functools.partial(jax.jit, static_argnames=("enc_size",))
def encoder_forward(images_nchw, conv_w, conv_b, pool_mat_padded, *, enc_size):
    """Pallas implementation of Encoder.forward (with stand-in backbone)."""
    # glue: NCHW (PyTorch) -> NHWC + lane-dense im2col.
    # TODO(synk): fold these input-side passes into the data producer at production scale.
    x = jnp.transpose(images_nchw, (0, 2, 3, 1)).astype(jnp.float32)
    B, H, W, Cin = x.shape
    Cout = conv_w.shape[-1]
    Ho, Wo = H // 2, W // 2
    HoWo = Ho * Wo
    S2p = pool_mat_padded.shape[0]
    Kp = 128                                   # zero-pad 9*Cin -> 128: lane-dense K operand

    xp = jnp.pad(x, ((0, 0), (1, 1), (1, 1), (0, 0)))
    taps = [xp[:, kh:kh + 2 * Ho:2, kw:kw + 2 * Wo:2, :]   # [B, Ho, Wo, Cin] per tap
            for kh in range(3) for kw in range(3)]
    cols = jnp.concatenate(taps, axis=-1).reshape(B, HoWo, 9 * Cin)
    cols = jnp.pad(cols, ((0, 0), (0, 0), (0, Kp - 9 * Cin)))
    cols = cols.astype(jnp.bfloat16)                       # bf16 MXU operand

    w2d = jnp.pad(conv_w.reshape(9 * Cin, Cout), ((0, Kp - 9 * Cin), (0, 0)))
    w2d = w2d.astype(jnp.bfloat16)                         # bf16 MXU operand (zero K-pad exact)
    b2d = conv_b.reshape(1, Cout).astype(jnp.float32)      # f32 elementwise
    p2 = pool_mat_padded.astype(jnp.float32)               # pool weights stay exact f32

    Bt = 2 if B % 2 == 0 else 1                            # batch blocking (M = Bt*HoWo)

    flops = 2 * B * HoWo * Kp * Cout + 2 * B * S2p * HoWo * Cout
    bytes_accessed = (cols.size * 2 + w2d.size * 2 + b2d.size * 4
                      + p2.size * 4 + B * S2p * Cout * 4)

    out = pl.pallas_call(
        fused_encoder_kernel,
        out_shape=jax.ShapeDtypeStruct((B, S2p, Cout), jnp.float32),
        grid=(B // Bt,),
        in_specs=[
            pl.BlockSpec((Bt, HoWo, Kp), lambda b: (b, 0, 0)),     # im2col operand
            pl.BlockSpec((Kp, Cout), lambda b: (0, 0)),            # conv weight (invariant)
            pl.BlockSpec((1, Cout), lambda b: (0, 0)),             # bias (invariant)
            pl.BlockSpec((S2p, HoWo), lambda b: (0, 0)),           # pool matrix (invariant)
        ],
        out_specs=pl.BlockSpec((Bt, S2p, Cout), lambda b: (b, 0, 0)),
        compiler_params=pltpu.CompilerParams(
            dimension_semantics=("parallel",),          # batch-block axis -> both v7x TCs
            vmem_limit_bytes=48 * 1024 * 1024),         # explicit, with v7x headroom
        cost_estimate=pl.CostEstimate(flops=flops, transcendentals=0,
                                      bytes_accessed=bytes_accessed),
    )(cols, w2d, b2d, p2)

    return out[:, :enc_size * enc_size, :]               # drop the padded pool rows


# ---------------------------------- main ------------------------------------

if __name__ == "__main__":
    key = jax.random.PRNGKey(0)
    k_img, k_w, k_b = jax.random.split(key, 3)

    # small shapes consistent with Encoder.forward: images [B, 3, H, W]
    B, Cin, H, W = 4, 3, 32, 32
    ENC_DIM = 128          # lane-dense stand-in for resnet50's 2048 (multiple of 128)
    ENC_SIZE = 7           # encoded_image_size default

    images = jax.random.normal(k_img, (B, Cin, H, W), jnp.float32)
    conv_w = 0.1 * jax.random.normal(k_w, (3, 3, Cin, ENC_DIM), jnp.float32)  # HWIO
    conv_b = 0.1 * jax.random.normal(k_b, (ENC_DIM,), jnp.float32)

    Ho, Wo = H // 2, W // 2
    pool_mat_padded = make_pool_matrix_padded(Ho, Wo, ENC_SIZE)   # host constant, hoisted

    out = encoder_forward(images, conv_w, conv_b, pool_mat_padded, enc_size=ENC_SIZE)
    out = jax.block_until_ready(out)
    assert out.shape == (B, ENC_SIZE * ENC_SIZE, ENC_DIM), out.shape

    # pure-JAX f32 reference for the same (stand-in backbone + adaptive pool) math
    x_nhwc = jnp.transpose(images, (0, 2, 3, 1))
    ref_feat = jax.lax.conv_general_dilated(
        x_nhwc, conv_w, window_strides=(2, 2), padding=((1, 1), (1, 1)),
        dimension_numbers=("NHWC", "HWIO", "NHWC"),
        precision=jax.lax.Precision.HIGHEST)
    ref_feat = jnp.maximum(ref_feat + conv_b, 0.0)                  # [B, Ho, Wo, C]
    ph = jnp.asarray(_pool_matrix_np(Ho, ENC_SIZE))
    pw = jnp.asarray(_pool_matrix_np(Wo, ENC_SIZE))
    ref_pool = jnp.einsum("ih,jw,bhwc->bijc", ph, pw, ref_feat,
                          precision=jax.lax.Precision.HIGHEST)
    ref_out = ref_pool.reshape(B, ENC_SIZE * ENC_SIZE, ENC_DIM)

    # bf16 MXU conv operands with f32 accumulation -> slightly loosened tolerance
    assert jnp.allclose(out, ref_out, atol=2e-2, rtol=2e-2), "mismatch vs reference"
    print("KERNEL_OK")
</pallas_src>

<mosaic_0001>
module attributes {stable_mosaic.version = 11 : i64} {
  func.func @fused_encoder_kernel(%arg0: i32, %arg1: memref<2x256x128xbf16, #tpu.memory_space<vmem>>, %arg2: memref<128x128xbf16, #tpu.memory_space<vmem>>, %arg3: memref<1x128xf32, #tpu.memory_space<vmem>>, %arg4: memref<56x256xf32, #tpu.memory_space<vmem>>, %arg5: memref<2x56x128xf32, #tpu.memory_space<vmem>>) attributes {dimension_semantics = [#tpu.dimension_semantics<parallel>], iteration_bounds = array<i64: 2>, scalar_prefetch = 0 : i64, scratch_operands = 0 : i64, tpu.core_type = #tpu.core_type<tc>, window_params = [{transform_indices = @transform_0, window_bounds = array<i64: 2, 256, 128>}, {pipeline_mode = #tpu.pipeline_mode<synchronous>, transform_indices = @transform_1, window_bounds = array<i64: 128, 128>}, {pipeline_mode = #tpu.pipeline_mode<synchronous>, transform_indices = @transform_2, window_bounds = array<i64: 1, 128>}, {pipeline_mode = #tpu.pipeline_mode<synchronous>, transform_indices = @transform_3, window_bounds = array<i64: 56, 256>}, {transform_indices = @transform_4, window_bounds = array<i64: 2, 56, 128>}]} {
    %c0 = arith.constant 0 : index
    %c0_0 = arith.constant 0 : index
    %c0_1 = arith.constant 0 : index
    %0 = vector.load %arg1[%c0, %c0_0, %c0_1] : memref<2x256x128xbf16, #tpu.memory_space<vmem>>, vector<2x256x128xbf16>
    %1 = vector.shape_cast %0 : vector<2x256x128xbf16> to vector<512x128xbf16>
    %c0_2 = arith.constant 0 : index
    %c0_3 = arith.constant 0 : index
    %2 = vector.load %arg2[%c0_2, %c0_3] : memref<128x128xbf16, #tpu.memory_space<vmem>>, vector<128x128xbf16>
    %cst = arith.constant dense<0.000000e+00> : vector<512x128xf32>
    %3 = tpu.matmul %1, %2, %cst {dimension_numbers = #tpu.dot_dimension_numbers<[1], [0], [0], [1], [0, 0, 1, 1], [], []>} : vector<512x128xbf16>, vector<128x128xbf16>, vector<512x128xf32> -> vector<512x128xf32>
    %c0_4 = arith.constant 0 : index
    %c0_5 = arith.constant 0 : index
    %4 = vector.load %arg3[%c0_4, %c0_5] : memref<1x128xf32, #tpu.memory_space<vmem>>, vector<1x128xf32>
    %5 = vector.broadcast %4 : vector<1x128xf32> to vector<512x128xf32>
    %6 = arith.addf %3, %5 : vector<512x128xf32>
    %cst_6 = arith.constant 0.000000e+00 : f32
    %7 = vector.broadcast %cst_6 : f32 to vector<512x128xf32>
    %8 = arith.maximumf %6, %7 : vector<512x128xf32>
    %c0_7 = arith.constant 0 : index
    %c0_8 = arith.constant 0 : index
    %9 = vector.load %arg4[%c0_7, %c0_8] : memref<56x256xf32, #tpu.memory_space<vmem>>, vector<56x256xf32>
    %10 = vector.extract_strided_slice %8 {offsets = [0, 0], sizes = [256, 128], strides = [1, 1]} : vector<512x128xf32> to vector<256x128xf32>
    %cst_9 = arith.constant dense<0.000000e+00> : vector<56x128xf32>
    %11 = tpu.matmul %9, %10, %cst_9 {dimension_numbers = #tpu.dot_dimension_numbers<[1], [0], [0], [1], [0, 0, 1, 1], [], []>} : vector<56x256xf32>, vector<256x128xf32>, vector<56x128xf32> -> vector<56x128xf32>
    %c0_10 = arith.constant 0 : index
    %c0_11 = arith.constant 0 : index
    %c0_12 = arith.constant 0 : index
    %12 = vector.load %arg5[%c0_10, %c0_11, %c0_12] : memref<2x56x128xf32, #tpu.memory_space<vmem>>, vector<1x56x128xf32>
    %13 = vector.shape_cast %12 : vector<1x56x128xf32> to vector<56x128xf32>
    %14 = vector.shape_cast %11 : vector<56x128xf32> to vector<1x56x128xf32>
    tpu.vector_store %arg5[%c0_10, %c0_11, %c0_12], %14 {strides = array<i32>} : memref<2x56x128xf32, #tpu.memory_space<vmem>>, vector<1x56x128xf32>,
    %15 = vector.extract_strided_slice %8 {offsets = [256, 0], sizes = [256, 128], strides = [1, 1]} : vector<512x128xf32> to vector<256x128xf32>
    %cst_13 = arith.constant dense<0.000000e+00> : vector<56x128xf32>
    %16 = tpu.matmul %9, %15, %cst_13 {dimension_numbers = #tpu.dot_dimension_numbers<[1], [0], [0], [1], [0, 0, 1, 1], [], []>} : vector<56x256xf32>, vector<256x128xf32>, vector<56x128xf32> -> vector<56x128xf32>
    %c1 = arith.constant 1 : index
    %c0_14 = arith.constant 0 : index
    %c0_15 = arith.constant 0 : index
    %17 = vector.load %arg5[%c1, %c0_14, %c0_15] : memref<2x56x128xf32, #tpu.memory_space<vmem>>, vector<1x56x128xf32>
    %18 = vector.shape_cast %17 : vector<1x56x128xf32> to vector<56x128xf32>
    %19 = vector.shape_cast %16 : vector<56x128xf32> to vector<1x56x128xf32>
    tpu.vector_store %arg5[%c1, %c0_14, %c0_15], %19 {strides = array<i32>} : memref<2x56x128xf32, #tpu.memory_space<vmem>>, vector<1x56x128xf32>,
    return
  }
  func.func @transform_0(%arg0: i32) -> (i32, i32, i32) {
    %c0_i32 = arith.constant 0 : i32
    %c0_i32_0 = arith.constant 0 : i32
    %c0_i32_1 = arith.constant 0 : i32
    return %arg0, %c0_i32, %c0_i32_0 : i32, i32, i32
  }
  func.func @transform_1(%arg0: i32) -> (i32, i32) {
    %c0_i32 = arith.constant 0 : i32
    %c0_i32_0 = arith.constant 0 : i32
    %c0_i32_1 = arith.constant 0 : i32
    return %c0_i32, %c0_i32_0 : i32, i32
  }
  func.func @transform_2(%arg0: i32) -> (i32, i32) {
    %c0_i32 = arith.constant 0 : i32
    %c0_i32_0 = arith.constant 0 : i32
    %c0_i32_1 = arith.constant 0 : i32
    return %c0_i32, %c0_i32_0 : i32, i32
  }
  func.func @transform_3(%arg0: i32) -> (i32, i32) {
    %c0_i32 = arith.constant 0 : i32
    %c0_i32_0 = arith.constant 0 : i32
    %c0_i32_1 = arith.constant 0 : i32
    return %c0_i32, %c0_i32_0 : i32, i32
  }
  func.func @transform_4(%arg0: i32) -> (i32, i32, i32) {
    %c0_i32 = arith.constant 0 : i32
    %c0_i32_0 = arith.constant 0 : i32
    %c0_i32_1 = arith.constant 0 : i32
    return %arg0, %c0_i32, %c0_i32_0 : i32, i32, i32
  }
}

</mosaic_0001>

<llo_original>
// kernel: encoder_forward.1
$region0: #{encoder_forward.1}
  #allocation0 [shape = 'u32[]', space=smem, size = 0x4, offset = 0x4, fixed_abs, tag = 'smem constant byte address 0x4 - core index']
  #allocation1 [shape = 'u32[144,128]{1,0:T(1,128)}', space=vmem, size = 0x12000, scoped, tag = 'internal scratch']
  %s0 = inlined_call_operand.vmem [shape: bf16[4,256,128], index: 0, kind: input, shape index: {}]
  %s1 = inlined_call_operand.vmem [shape: bf16[128,128], index: 1, kind: input, shape index: {}]
  %s2 = inlined_call_operand.vmem [shape: f32[1,128], index: 2, kind: input, shape index: {}]
  %s3 = inlined_call_operand.vmem [shape: f32[56,256], index: 3, kind: input, shape index: {}]
  %s4 = inlined_call_operand.vmem [shape: f32[4,56,128], index: 4, kind: output, shape index: {}]
  %s5 = sld [smem:[#allocation0]]
  $region49: #{encoder_forward.1} parent=0
    _
  %s7 = ssub.s32 1, %s5
  %s8 = scalar_select 0, %s7, %s5
  loop: start=0, step=1, limit=4
  $region2: #{encoder_forward.1} parent=0 // loop_pre_header
    _
  $region3: #{encoder_forward.1} parent=0 // loop_header
    %s10 = sphi 0, %s14
    %p11 = scmp.ge.s32.totalorder %s10, 4
    %s20 = sphi 0, %s22
    %s23 = sphi 0, %s20
    %s24 = sphi 0, %s23
    %s40 = sphi 0, %s24
    %s44 = sphi 0, %s44
    %s46 = sphi 0, %s44
    %s47 = sphi 0, %s46
    %s61 = sphi 0, %s47
    %s65 = sphi 0, %s65
    %s67 = sphi 0, %s65
    %s68 = sphi 0, %s67
    %s82 = sphi 0, %s68
    %s86 = sphi 0, %s86
    %s88 = sphi 0, %s86
    %s89 = sphi 0, %s88
    %s103 = sphi 0, %s89
    %s109 = sphi 0, %s111
    %s112 = sphi 0, %s109
    %s113 = sphi 0, %s112
    %s129 = sphi 0, %s113
  $region4: #{encoder_forward.1} parent=0 // loop_header_branch
    %13 = sbr.rel (%p11) target = $region8
  $region5: #{encoder_forward.1} parent=0 // loop_body
    %s15 = ssub.s32 %s10, 1
    %s16 = ssub.s32 %s10, 2
    %s17 = sadd.s32 %s10, 1
    %s18 = ssub.s32 %s10, %s17
    %p19 = scmp.eq.s32.totalorder %s18, 0
    %s21 = sadd.s32 %s20, 1
    %s22 = scalar_select %p19, %s20, %s21
    %p25 = pneg %p19
    %p26 = scmp.eq.s32.totalorder %s10, 1
    %p27 = por %p25, %p26
    %p28 = scmp.ne.s32.totalorder %s20, %s23
    %p29 = scmp.eq.s32.totalorder %s10, 0
    %p30 = por %p28, %p29
    %p31 = scmp.ne.s32.totalorder %s20, %s23
    %p32 = scmp.eq.s32.totalorder %s15, 1
    %p33 = por %p31, %p32
    %p34 = scmp.ne.s32.totalorder %s23, %s24
    %p35 = scmp.eq.s32.totalorder %s15, 0
    %p36 = por %p34, %p35
    %p37 = scmp.ne.s32.totalorder %s23, %s24
    %p38 = scmp.eq.s32.totalorder %s16, 1
    %p39 = por %p37, %p38
    %p41 = scmp.ne.s32.totalorder %s24, %s40
    %p42 = scmp.eq.s32.totalorder %s16, 0
    %p43 = por %p41, %p42
    %s45 = sadd.s32 %s44, 1
    %p48 = scmp.eq.s32.totalorder %s10, 1
    %p49 = scmp.ne.s32.totalorder %s44, %s46
    %p50 = scmp.eq.s32.totalorder %s10, 0
    %p51 = por %p49, %p50
    %p52 = scmp.ne.s32.totalorder %s44, %s46
    %p53 = scmp.eq.s32.totalorder %s15, 1
    %p54 = por %p52, %p53
    %p55 = scmp.ne.s32.totalorder %s46, %s47
    %p56 = scmp.eq.s32.totalorder %s15, 0
    %p57 = por %p55, %p56
    %p58 = scmp.ne.s32.totalorder %s46, %s47
    %p59 = scmp.eq.s32.totalorder %s16, 1
    %p60 = por %p58, %p59
    %p62 = scmp.ne.s32.totalorder %s47, %s61
    %p63 = scmp.eq.s32.totalorder %s16, 0
    %p64 = por %p62, %p63
    %s66 = sadd.s32 %s65, 1
    %p69 = scmp.eq.s32.totalorder %s10, 1
    %p70 = scmp.ne.s32.totalorder %s65, %s67
    %p71 = scmp.eq.s32.totalorder %s10, 0
    %p72 = por %p70, %p71
    %p73 = scmp.ne.s32.totalorder %s65, %s67
    %p74 = scmp.eq.s32.totalorder %s15, 1
    %p75 = por %p73, %p74
    %p76 = scmp.ne.s32.totalorder %s67, %s68
    %p77 = scmp.eq.s32.totalorder %s15, 0
    %p78 = por %p76, %p77
    %p79 = scmp.ne.s32.totalorder %s67, %s68
    %p80 = scmp.eq.s32.totalorder %s16, 1
    %p81 = por %p79, %p80
    %p83 = scmp.ne.s32.totalorder %s68, %s82
    %p84 = scmp.eq.s32.totalorder %s16, 0
    %p85 = por %p83, %p84
    %s87 = sadd.s32 %s86, 1
    %p90 = scmp.eq.s32.totalorder %s10, 1
    %p91 = scmp.ne.s32.totalorder %s86, %s88
    %p92 = scmp.eq.s32.totalorder %s10, 0
    %p93 = por %p91, %p92
    %p94 = scmp.ne.s32.totalorder %s86, %s88
    %p95 = scmp.eq.s32.totalorder %s15, 1
    %p96 = por %p94, %p95
    %p97 = scmp.ne.s32.totalorder %s88, %s89
    %p98 = scmp.eq.s32.totalorder %s15, 0
    %p99 = por %p97, %p98
    %p100 = scmp.ne.s32.totalorder %s88, %s89
    %p101 = scmp.eq.s32.totalorder %s16, 1
    %p102 = por %p100, %p101
    %p104 = scmp.ne.s32.totalorder %s89, %s103
    %p105 = scmp.eq.s32.totalorder %s16, 0
    %p106 = por %p104, %p105
    %s107 = ssub.s32 %s10, %s17
    %p108 = scmp.eq.s32.totalorder %s107, 0
    %s110 = sadd.s32 %s109, 1
    %s111 = scalar_select %p108, %s109, %s110
    %p114 = pneg %p108
    %p115 = scmp.eq.s32.totalorder %s10, 1
    %p116 = por %p114, %p115
    %p117 = scmp.ne.s32.totalorder %s109, %s112
    %p118 = scmp.eq.s32.totalorder %s10, 0
    %p119 = por %p117, %p118
    %p120 = scmp.ne.s32.totalorder %s109, %s112
    %p121 = scmp.eq.s32.totalorder %s15, 1
    %p122 = por %p120, %p121
    %p123 = scmp.ne.s32.totalorder %s112, %s113
    %p124 = scmp.eq.s32.totalorder %s15, 0
    %p125 = por %p123, %p124
    %p126 = scmp.ne.s32.totalorder %s112, %s113
    %p127 = scmp.eq.s32.totalorder %s16, 1
    %p128 = por %p126, %p127
    %p130 = scmp.ne.s32.totalorder %s113, %s129
    %p131 = scmp.eq.s32.totalorder %s16, 0
    %p132 = por %p130, %p131
    %p133 = scmp.le.s32.totalorder 1, %s10
    %p134 = scmp.lt.s32.totalorder %s10, 3
    %p135 = pnand %p133, %p134
    %p136 = pneg %p135
    // Predicated region
    $region9: #{encoder_forward.1} parent=5 // pred_check
      _
    $region10: #{encoder_forward.1} parent=5 // pred_check_branch
      %138 = sbr.rel (%p135) target = $region12
    $region11: #{encoder_forward.1} parent=5 // pred_region
      %s139 = ssub.s32 %s10, 1
      // Predicated region
      $region13: #{encoder_forward.1} parent=11 // pred_check
        %p140 = pneg %p57
      $region14: #{encoder_forward.1} parent=11 // pred_check_branch
        %142 = sbr.rel (%p140) target = $region16
      $region15: #{encoder_forward.1} parent=11 // pred_region
        _
      $region16: #{encoder_forward.1} parent=11 // pred_fallthru
        _
      // Predicated region
      $region17: #{encoder_forward.1} parent=11 // pred_check
        %p143 = pneg %p78
      $region18: #{encoder_forward.1} parent=11 // pred_check_branch
        %145 = sbr.rel (%p143) target = $region20
      $region19: #{encoder_forward.1} parent=11 // pred_region
        _
      $region20: #{encoder_forward.1} parent=11 // pred_fallthru
        _
      // Predicated region
      $region21: #{encoder_forward.1} parent=11 // pred_check
        %p146 = pneg %p99
      $region22: #{encoder_forward.1} parent=11 // pred_check_branch
        %148 = sbr.rel (%p146) target = $region24
      $region23: #{encoder_forward.1} parent=11 // pred_region
        _
      $region24: #{encoder_forward.1} parent=11 // pred_fallthru
        _
    $region12: #{encoder_forward.1} parent=5 // pred_fallthru
      _
    %p149 = scmp.lt.s32.totalorder %s10, 2
    // Predicated region
    $region25: #{encoder_forward.1} parent=5 // pred_check
      %p150 = pneg %p149
    $region26: #{encoder_forward.1} parent=5 // pred_check_branch
      %152 = sbr.rel (%p150) target = $region28
    $region27: #{encoder_forward.1} parent=5 // pred_region
      // Predicated region
      $region29: #{encoder_forward.1} parent=27 // pred_check
        %p153 = pneg %p30
      $region30: #{encoder_forward.1} parent=27 // pred_check_branch
        %155 = sbr.rel (%p153) target = $region32
      $region31: #{encoder_forward.1} parent=27 // pred_region
        %s156 = smul.u32 2, %s10
        %p157 = scmp.lt.s32.totalorder %s156, 3
        %s158 = scalar_select %p157, %s156, 3
        %s159 = smul.addr %s158, 32
        %s160 = smul.addr %s159, 4
        %s161 = scalar_lea.vmem %s0, %s160
        %s162 = smul.u32 2, %s10
      $region32: #{encoder_forward.1} parent=27 // pred_fallthru
        _
    $region28: #{encoder_forward.1} parent=5 // pred_fallthru
      _
    %p163 = scmp.le.s32.totalorder 1, %s10
    %p164 = scmp.lt.s32.totalorder %s10, 3
    %p165 = pnand %p163, %p164
    %p166 = pneg %p165
    // Predicated region
    $region33: #{encoder_forward.1} parent=5 // pred_check
      _
    $region34: #{encoder_forward.1} parent=5 // pred_check_branch
      %168 = sbr.rel (%p165) target = $region36
    $region35: #{encoder_forward.1} parent=5 // pred_region
      %s169 = ssub.s32 %s10, 1
      %s170 = smul.u32 2, %s15
      %p171 = scmp.lt.s32.totalorder %s170, 3
      %s172 = scalar_select %p171, %s170, 3
      %s173 = smul.addr %s172, 32
      %s174 = smul.addr %s173, 4
      %s175 = scalar_lea.vmem %s0, %s174
      %p176 = pneg %p36
      %p177 = pneg %p33
      %p178 = pneg %p57
      %p179 = pneg %p54
      %p180 = pneg %p78
      %p181 = pneg %p75
      %p182 = pneg %p99
      %p183 = pneg %p96
      %p184 = pneg %p125
      %p185 = pneg %p122
      %s186 = smul.u32 2, %s15
      %p187 = scmp.lt.s32.totalorder %s186, 3
      %s188 = scalar_select %p187, %s186, 3
      %s189 = smul.addr %s188, 7
      %s190 = smul.addr %s189, 8
      %s191 = scalar_lea.vmem %s4, %s190
      %s192 = smul.u32 2, %s15
      %p193 = scmp.lt.s32.totalorder %s192, 3
      %s194 = scalar_select %p193, %s192, 3
      %s195 = smul.addr %s194, 32
      %s196 = smul.addr %s195, 4
      %s197 = scalar_lea.vmem %s0, %s196
      %s198 = smul.u32 2, %s15
      %s199 = smul.u32 2, %s15
      %p200 = scmp.lt.s32.totalorder %s199, 3
      %s201 = scalar_select %p200, %s199, 3
      %s202 = smul.addr %s201, 7
      %s203 = smul.addr %s202, 8
      %s204 = scalar_lea.vmem %s4, %s203
      %s205 = smul.u32 2, %s15
      %v207 = vld [vmem:[%s197] sm:$0xf]
      %v208 = vld [vmem:[%s197 + $0x4] sm:$0xf]
      %v209 = vld [vmem:[%s197 + $0x8] sm:$0xf]
      %v210 = vld [vmem:[%s197 + $0xc] sm:$0xf]
      %v211 = vld [vmem:[%s197 + $0x10] sm:$0xf]
      %v212 = vld [vmem:[%s197 + $0x14] sm:$0xf]
      %v213 = vld [vmem:[%s197 + $0x18] sm:$0xf]
      %v214 = vld [vmem:[%s197 + $0x1c] sm:$0xf]
      %v215 = vld [vmem:[%s197 + $0x20] sm:$0xf]
      %v216 = vld [vmem:[%s197 + $0x24] sm:$0xf]
      %v217 = vld [vmem:[%s197 + $0x28] sm:$0xf]
      %v218 = vld [vmem:[%s197 + $0x2c] sm:$0xf]
      %v219 = vld [vmem:[%s197 + $0x30] sm:$0xf]
      %v220 = vld [vmem:[%s197 + $0x34] sm:$0xf]
      %v221 = vld [vmem:[%s197 + $0x38] sm:$0xf]
      %v222 = vld [vmem:[%s197 + $0x3c] sm:$0xf]
      %v223 = vld [vmem:[%s197 + $0x40] sm:$0xf]
      %v224 = vld [vmem:[%s197 + $0x44] sm:$0xf]
      %v225 = vld [vmem:[%s197 + $0x48] sm:$0xf]
      %v226 = vld [vmem:[%s197 + $0x4c] sm:$0xf]
      %v227 = vld [vmem:[%s197 + $0x50] sm:$0xf]
      %v228 = vld [vmem:[%s197 + $0x54] sm:$0xf]
      %v229 = vld [vmem:[%s197 + $0x58] sm:$0xf]
      %v230 = vld [vmem:[%s197 + $0x5c] sm:$0xf]
      %v231 = vld [vmem:[%s197 + $0x60] sm:$0xf]
      %v232 = vld [vmem:[%s197 + $0x64] sm:$0xf]
      %v233 = vld [vmem:[%s197 + $0x68] sm:$0xf]
      %v234 = vld [vmem:[%s197 + $0x6c] sm:$0xf]
      %v235 = vld [vmem:[%s197 + $0x70] sm:$0xf]
      %v236 = vld [vmem:[%s197 + $0x74] sm:$0xf]
      %v237 = vld [vmem:[%s197 + $0x78] sm:$0xf]
      %v238 = vld [vmem:[%s197 + $0x7c] sm:$0xf]
      %v239 = vld [vmem:[%s197 + $0x80] sm:$0xf]
      %v240 = vld [vmem:[%s197 + $0x84] sm:$0xf]
      %v241 = vld [vmem:[%s197 + $0x88] sm:$0xf]
      %v242 = vld [vmem:[%s197 + $0x8c] sm:$0xf]
      %v243 = vld [vmem:[%s197 + $0x90] sm:$0xf]
      %v244 = vld [vmem:[%s197 + $0x94] sm:$0xf]
      %v245 = vld [vmem:[%s197 + $0x98] sm:$0xf]
      %v246 = vld [vmem:[%s197 + $0x9c] sm:$0xf]
      %v247 = vld [vmem:[%s197 + $0xa0] sm:$0xf]
      %v248 = vld [vmem:[%s197 + $0xa4] sm:$0xf]
      %v249 = vld [vmem:[%s197 + $0xa8] sm:$0xf]
      %v250 = vld [vmem:[%s197 + $0xac] sm:$0xf]
      %v251 = vld [vmem:[%s197 + $0xb0] sm:$0xf]
      %v252 = vld [vmem:[%s197 + $0xb4] sm:$0xf]
      %v253 = vld [vmem:[%s197 + $0xb8] sm:$0xf]
      %v254 = vld [vmem:[%s197 + $0xbc] sm:$0xf]
      %v255 = vld [vmem:[%s197 + $0xc0] sm:$0xf]
      %v256 = vld [vmem:[%s197 + $0xc4] sm:$0xf]
      %v257 = vld [vmem:[%s197 + $0xc8] sm:$0xf]
      %v258 = vld [vmem:[%s197 + $0xcc] sm:$0xf]
      %v259 = vld [vmem:[%s197 + $0xd0] sm:$0xf]
      %v260 = vld [vmem:[%s197 + $0xd4] sm:$0xf]
      %v261 = vld [vmem:[%s197 + $0xd8] sm:$0xf]
      %v262 = vld [vmem:[%s197 + $0xdc] sm:$0xf]
      %v263 = vld [vmem:[%s197 + $0xe0] sm:$0xf]
      %v264 = vld [vmem:[%s197 + $0xe4] sm:$0xf]
      %v265 = vld [vmem:[%s197 + $0xe8] sm:$0xf]
      %v266 = vld [vmem:[%s197 + $0xec] sm:$0xf]
      %v267 = vld [vmem:[%s197 + $0xf0] sm:$0xf]
      %v268 = vld [vmem:[%s197 + $0xf4] sm:$0xf]
      %v269 = vld [vmem:[%s197 + $0xf8] sm:$0xf]
      %v270 = vld [vmem:[%s197 + $0xfc] sm:$0xf]
      %v271 = vld [vmem:[%s1] sm:$0xf]
      %v272 = vld [vmem:[%s1 + $0x4] sm:$0xf]
      %v273 = vld [vmem:[%s1 + $0x8] sm:$0xf]
      %v274 = vld [vmem:[%s1 + $0xc] sm:$0xf]
      %v275 = vld [vmem:[%s1 + $0x10] sm:$0xf]
      %v276 = vld [vmem:[%s1 + $0x14] sm:$0xf]
      %v277 = vld [vmem:[%s1 + $0x18] sm:$0xf]
      %v278 = vld [vmem:[%s1 + $0x1c] sm:$0xf]
      %v279 = vld [vmem:[%s1 + $0x20] sm:$0xf]
      %v280 = vld [vmem:[%s1 + $0x24] sm:$0xf]
      %v281 = vld [vmem:[%s1 + $0x28] sm:$0xf]
      %v282 = vld [vmem:[%s1 + $0x2c] sm:$0xf]
      %v283 = vld [vmem:[%s1 + $0x30] sm:$0xf]
      %v284 = vld [vmem:[%s1 + $0x34] sm:$0xf]
      %v285 = vld [vmem:[%s1 + $0x38] sm:$0xf]
      %v286 = vld [vmem:[%s1 + $0x3c] sm:$0xf]
      %v287 = vld [vmem:[%s2] sm:$0x1]
      %v289 = vlaneseq
      %v290 = vshrl.u32 %v289, 7
      %v291 = vsub.s32 0, %v290
      %v292 = vrot.slane %v287, %v291
      %v358 = vunpack.c.l.b16 %v207
      %v359 = vunpack.c.l.b16 %v208
      %v360 = vunpack.c.l.b16 %v209
      %v361 = vunpack.c.l.b16 %v210
      %v362 = vunpack.c.l.b16 %v211
      %v363 = vunpack.c.l.b16 %v212
      %v364 = vunpack.c.l.b16 %v213
      %v365 = vunpack.c.l.b16 %v214
      %v366 = vunpack.c.l.b16 %v215
      %v367 = vunpack.c.l.b16 %v216
      %v368 = vunpack.c.l.b16 %v217
      %v369 = vunpack.c.l.b16 %v218
      %v370 = vunpack.c.l.b16 %v219
      %v371 = vunpack.c.l.b16 %v220
      %v372 = vunpack.c.l.b16 %v221
      %v373 = vunpack.c.l.b16 %v222
      %v374 = vunpack.c.l.b16 %v223
      %v375 = vunpack.c.l.b16 %v224
      %v376 = vunpack.c.l.b16 %v225
      %v377 = vunpack.c.l.b16 %v226
      %v378 = vunpack.c.l.b16 %v227
      %v379 = vunpack.c.l.b16 %v228
      %v380 = vunpack.c.l.b16 %v229
      %v381 = vunpack.c.l.b16 %v230
      %v382 = vunpack.c.l.b16 %v231
      %v383 = vunpack.c.l.b16 %v232
      %v384 = vunpack.c.l.b16 %v233
      %v385 = vunpack.c.l.b16 %v234
      %v386 = vunpack.c.l.b16 %v235
      %v387 = vunpack.c.l.b16 %v236
      %v388 = vunpack.c.l.b16 %v237
      %v389 = vunpack.c.l.b16 %v238
      %v390 = vunpack.c.l.b16 %v239
      %v391 = vunpack.c.l.b16 %v240
      %v392 = vunpack.c.l.b16 %v241
      %v393 = vunpack.c.l.b16 %v242
      %v394 = vunpack.c.l.b16 %v243
      %v395 = vunpack.c.l.b16 %v244
      %v396 = vunpack.c.l.b16 %v245
      %v397 = vunpack.c.l.b16 %v246
      %v398 = vunpack.c.l.b16 %v247
      %v399 = vunpack.c.l.b16 %v248
      %v400 = vunpack.c.l.b16 %v249
      %v401 = vunpack.c.l.b16 %v250
      %v402 = vunpack.c.l.b16 %v251
      %v403 = vunpack.c.l.b16 %v252
      %v404 = vunpack.c.l.b16 %v253
      %v405 = vunpack.c.l.b16 %v254
      %v406 = vunpack.c.l.b16 %v255
      %v407 = vunpack.c.l.b16 %v256
      %v408 = vunpack.c.l.b16 %v257
      %v409 = vunpack.c.l.b16 %v258
      %v410 = vunpack.c.l.b16 %v259
      %v411 = vunpack.c.l.b16 %v260
      %v412 = vunpack.c.l.b16 %v261
      %v413 = vunpack.c.l.b16 %v262
      %v414 = vunpack.c.l.b16 %v263
      %v415 = vunpack.c.l.b16 %v264
      %v416 = vunpack.c.l.b16 %v265
      %v417 = vunpack.c.l.b16 %v266
      %v418 = vunpack.c.l.b16 %v267
      %v419 = vunpack.c.l.b16 %v268
      %v420 = vunpack.c.l.b16 %v269
      %v421 = vunpack.c.l.b16 %v270
      %v422 = vpack.c.b16 %v359, %v358
      %v423 = vpack.c.b16 %v361, %v360
      %v424 = vpack.c.b16 %v363, %v362
      %v425 = vpack.c.b16 %v365, %v364
      %v426 = vpack.c.b16 %v367, %v366
      %v427 = vpack.c.b16 %v369, %v368
      %v428 = vpack.c.b16 %v371, %v370
      %v429 = vpack.c.b16 %v373, %v372
      %v430 = vpack.c.b16 %v375, %v374
      %v431 = vpack.c.b16 %v377, %v376
      %v432 = vpack.c.b16 %v379, %v378
      %v433 = vpack.c.b16 %v381, %v380
      %v434 = vpack.c.b16 %v383, %v382
      %v435 = vpack.c.b16 %v385, %v384
      %v436 = vpack.c.b16 %v387, %v386
      %v437 = vpack.c.b16 %v389, %v388
      %v438 = vpack.c.b16 %v391, %v390
      %v439 = vpack.c.b16 %v393, %v392
      %v440 = vpack.c.b16 %v395, %v394
      %v441 = vpack.c.b16 %v397, %v396
      %v442 = vpack.c.b16 %v399, %v398
      %v443 = vpack.c.b16 %v401, %v400
      %v444 = vpack.c.b16 %v403, %v402
      %v445 = vpack.c.b16 %v405, %v404
      %v446 = vpack.c.b16 %v407, %v406
      %v447 = vpack.c.b16 %v409, %v408
      %v448 = vpack.c.b16 %v411, %v410
      %v449 = vpack.c.b16 %v413, %v412
      %v450 = vpack.c.b16 %v415, %v414
      %v451 = vpack.c.b16 %v417, %v416
      %v452 = vpack.c.b16 %v419, %v418
      %v453 = vpack.c.b16 %v421, %v420
      %v502 = vunpack.c.l.b16 %v271
      %v503 = vunpack.c.l.b16 %v272
      %v504 = vunpack.c.l.b16 %v273
      %v505 = vunpack.c.l.b16 %v274
      %v506 = vunpack.c.l.b16 %v275
      %v507 = vunpack.c.l.b16 %v276
      %v508 = vunpack.c.l.b16 %v277
      %v509 = vunpack.c.l.b16 %v278
      %v510 = vunpack.c.l.b16 %v279
      %v511 = vunpack.c.l.b16 %v280
      %v512 = vunpack.c.l.b16 %v281
      %v513 = vunpack.c.l.b16 %v282
      %v514 = vunpack.c.l.b16 %v283
      %v515 = vunpack.c.l.b16 %v284
      %v516 = vunpack.c.l.b16 %v285
      %v517 = vunpack.c.l.b16 %v286
      %v518 = vpack.c.b16 %v503, %v502
      %v519 = vpack.c.b16 %v505, %v504
      %v520 = vpack.c.b16 %v507, %v506
      %v521 = vpack.c.b16 %v509, %v508
      %v522 = vpack.c.b16 %v511, %v510
      %v523 = vpack.c.b16 %v513, %v512
      %v524 = vpack.c.b16 %v515, %v514
      %v525 = vpack.c.b16 %v517, %v516
      %534 = vmatprep.subr.bf16.mxu0 0
      %535 = vmatpush1.bf16.msra.mxu0 %v525
      %536 = vmatprep.subr.bf16.mxu0 0
      %537 = vmatpush1.bf16.msra.mxu0 %v524
      %538 = vmatprep.subr.bf16.mxu0 0
      %539 = vmatpush1.bf16.msra.mxu0 %v523
      %540 = vmatprep.subr.bf16.mxu0 0
      %541 = vmatpush1.bf16.msra.mxu0 %v522
      %542 = vmatprep.subr.bf16.mxu0 0
      %543 = vmatpush1.bf16.msra.mxu0 %v521
      %544 = vmatprep.subr.bf16.mxu0 0
      %545 = vmatpush1.bf16.msra.mxu0 %v520
      %546 = vmatprep.subr.bf16.mxu0 0
      %547 = vmatpush1.bf16.msra.mxu0 %v519
      %548 = vmatprep.subr.bf16.mxu0 0
      %549 = vmatpush1.bf16.msra.mxu0 %v518
      %550 = vmatprep.subr.bf16.mxu0 0
      %551 = vmatpush2.bf16.msra.mxu0 0
      %552 = vmatprep.subr.bf16.mxu0 0
      %553 = vmatpush2.bf16.msra.mxu0 0
      %554 = vmatprep.subr.bf16.mxu0 0
      %555 = vmatpush2.bf16.msra.mxu0 0
      %556 = vmatprep.subr.bf16.mxu0 0
      %557 = vmatpush2.bf16.msra.mxu0 0
      %558 = vmatprep.subr.bf16.mxu0 0
      %559 = vmatpush2.bf16.msra.mxu0 0
      %560 = vmatprep.subr.bf16.mxu0 0
      %561 = vmatpush2.bf16.msra.mxu0 0
      %562 = vmatprep.subr.bf16.mxu0 0
      %563 = vmatpush2.bf16.msra.mxu0 0
      %564 = vmatprep.subr.bf16.mxu0 0
      %565 = vmatpush2.bf16.msra.mxu0 0
      %566 = vmatprep.mubr.bf16.mxu0 0
      %567 = vmatmul.mubr.bf16.gmra.mxu0 %v422
      %v568 = vpop.f32.mrf.mxu0
      %v569 = vadd.f32 %v292, %v568
      %v570 = vpop.f32.mrf.mxu0
      %v571 = vpop.f32.mrf.mxu0
      %v572 = vadd.f32 %v292, %v571
      %v573 = vpop.f32.mrf.mxu0
      %574 = vmatprep.mubr.bf16.mxu0 0
      %575 = vmatmul.mubr.bf16.gmra.mxu0 %v423
      %v576 = vpop.f32.mrf.mxu0
      %v577 = vadd.f32 %v292, %v576
      %v578 = vpop.f32.mrf.mxu0
      %v579 = vpop.f32.mrf.mxu0
      %v580 = vadd.f32 %v292, %v579
      %v581 = vpop.f32.mrf.mxu0
      %582 = vmatprep.mubr.bf16.mxu0 0
      %583 = vmatmul.mubr.bf16.gmra.mxu0 %v424
      %v584 = vpop.f32.mrf.mxu0
      %v585 = vadd.f32 %v292, %v584
      %v586 = vpop.f32.mrf.mxu0
      %v587 = vpop.f32.mrf.mxu0
      %v588 = vadd.f32 %v292, %v587
      %v589 = vpop.f32.mrf.mxu0
      %590 = vmatprep.mubr.bf16.mxu0 0
      %591 = vmatmul.mubr.bf16.gmra.mxu0 %v425
      %v592 = vpop.f32.mrf.mxu0
      %v593 = vadd.f32 %v292, %v592
      %v594 = vpop.f32.mrf.mxu0
      %v595 = vpop.f32.mrf.mxu0
      %v596 = vadd.f32 %v292, %v595
      %v597 = vpop.f32.mrf.mxu0
      %598 = vmatprep.mubr.bf16.mxu0 0
      %599 = vmatmul.mubr.bf16.gmra.mxu0 %v426
      %v600 = vpop.f32.mrf.mxu0
      %v601 = vadd.f32 %v292, %v600
      %v602 = vpop.f32.mrf.mxu0
      %v603 = vpop.f32.mrf.mxu0
      %v604 = vadd.f32 %v292, %v603
      %v605 = vpop.f32.mrf.mxu0
      %606 = vmatprep.mubr.bf16.mxu0 0
      %607 = vmatmul.mubr.bf16.gmra.mxu0 %v427
      %v608 = vpop.f32.mrf.mxu0
      %v609 = vadd.f32 %v292, %v608
      %v610 = vpop.f32.mrf.mxu0
      %v611 = vpop.f32.mrf.mxu0
      %v612 = vadd.f32 %v292, %v611
      %v613 = vpop.f32.mrf.mxu0
      %614 = vmatprep.mubr.bf16.mxu0 0
      %615 = vmatmul.mubr.bf16.gmra.mxu0 %v428
      %v616 = vpop.f32.mrf.mxu0
      %v617 = vadd.f32 %v292, %v616
      %v618 = vpop.f32.mrf.mxu0
      %v619 = vpop.f32.mrf.mxu0
      %v620 = vadd.f32 %v292, %v619
      %v621 = vpop.f32.mrf.mxu0
      %622 = vmatprep.mubr.bf16.mxu0 0
      %623 = vmatmul.mubr.bf16.gmra.mxu0 %v429
      %v624 = vpop.f32.mrf.mxu0
      %v625 = vadd.f32 %v292, %v624
      %v626 = vpop.f32.mrf.mxu0
      %v627 = vpop.f32.mrf.mxu0
      %v628 = vadd.f32 %v292, %v627
      %v629 = vpop.f32.mrf.mxu0
      %630 = vmatprep.mubr.bf16.mxu0 0
      %631 = vmatmul.mubr.bf16.gmra.mxu0 %v430
      %v632 = vpop.f32.mrf.mxu0
      %v633 = vadd.f32 %v292, %v632
      %v634 = vpop.f32.mrf.mxu0
      %v635 = vpop.f32.mrf.mxu0
      %v636 = vadd.f32 %v292, %v635
      %v637 = vpop.f32.mrf.mxu0
      %638 = vmatprep.mubr.bf16.mxu0 0
      %639 = vmatmul.mubr.bf16.gmra.mxu0 %v431
      %v640 = vpop.f32.mrf.mxu0
      %v641 = vadd.f32 %v292, %v640
      %v642 = vpop.f32.mrf.mxu0
      %v643 = vpop.f32.mrf.mxu0
      %v644 = vadd.f32 %v292, %v643
      %v645 = vpop.f32.mrf.mxu0
      %646 = vmatprep.mubr.bf16.mxu0 0
      %647 = vmatmul.mubr.bf16.gmra.mxu0 %v432
      %v648 = vpop.f32.mrf.mxu0
      %v649 = vadd.f32 %v292, %v648
      %v650 = vpop.f32.mrf.mxu0
      %v651 = vpop.f32.mrf.mxu0
      %v652 = vadd.f32 %v292, %v651
      %v653 = vpop.f32.mrf.mxu0
      %654 = vmatprep.mubr.bf16.mxu0 0
      %655 = vmatmul.mubr.bf16.gmra.mxu0 %v433
      %v656 = vpop.f32.mrf.mxu0
      %v657 = vadd.f32 %v292, %v656
      %v658 = vpop.f32.mrf.mxu0
      %v659 = vpop.f32.mrf.mxu0
      %v660 = vadd.f32 %v292, %v659
      %v661 = vpop.f32.mrf.mxu0
      %662 = vmatprep.mubr.bf16.mxu0 0
      %663 = vmatmul.mubr.bf16.gmra.mxu0 %v434
      %v664 = vpop.f32.mrf.mxu0
      %v665 = vadd.f32 %v292, %v664
      %v666 = vpop.f32.mrf.mxu0
      %v667 = vpop.f32.mrf.mxu0
      %v668 = vadd.f32 %v292, %v667
      %v669 = vpop.f32.mrf.mxu0
      %670 = vmatprep.mubr.bf16.mxu0 0
      %671 = vmatmul.mubr.bf16.gmra.mxu0 %v435
      %v672 = vpop.f32.mrf.mxu0
      %v673 = vadd.f32 %v292, %v672
      %v674 = vpop.f32.mrf.mxu0
      %v675 = vpop.f32.mrf.mxu0
      %v676 = vadd.f32 %v292, %v675
      %v677 = vpop.f32.mrf.mxu0
      %678 = vmatprep.mubr.bf16.mxu0 0
      %679 = vmatmul.mubr.bf16.gmra.mxu0 %v436
      %v680 = vpop.f32.mrf.mxu0
      %v681 = vadd.f32 %v292, %v680
      %v682 = vpop.f32.mrf.mxu0
      %v683 = vpop.f32.mrf.mxu0
      %v684 = vadd.f32 %v292, %v683
      %v685 = vpop.f32.mrf.mxu0
      %686 = vmatprep.mubr.bf16.mxu0 0
      %687 = vmatmul.mubr.bf16.gmra.mxu0 %v437
      %v688 = vpop.f32.mrf.mxu0
      %v689 = vadd.f32 %v292, %v688
      %v690 = vpop.f32.mrf.mxu0
      %v691 = vpop.f32.mrf.mxu0
      %v692 = vadd.f32 %v292, %v691
      %v693 = vpop.f32.mrf.mxu0
      %694 = vmatprep.mubr.bf16.mxu0 0
      %695 = vmatmul.mubr.bf16.gmra.mxu0 %v438
      %v696 = vpop.f32.mrf.mxu0
      %v697 = vadd.f32 %v292, %v696
      %v698 = vpop.f32.mrf.mxu0
      %v699 = vpop.f32.mrf.mxu0
      %v700 = vadd.f32 %v292, %v699
      %v701 = vpop.f32.mrf.mxu0
      %702 = vmatprep.mubr.bf16.mxu0 0
      %703 = vmatmul.mubr.bf16.gmra.mxu0 %v439
      %v704 = vpop.f32.mrf.mxu0
      %v705 = vadd.f32 %v292, %v704
      %v706 = vpop.f32.mrf.mxu0
      %v707 = vpop.f32.mrf.mxu0
      %v708 = vadd.f32 %v292, %v707
      %v709 = vpop.f32.mrf.mxu0
      %710 = vmatprep.mubr.bf16.mxu0 0
      %711 = vmatmul.mubr.bf16.gmra.mxu0 %v440
      %v712 = vpop.f32.mrf.mxu0
      %v713 = vadd.f32 %v292, %v712
      %v714 = vpop.f32.mrf.mxu0
      %v715 = vpop.f32.mrf.mxu0
      %v716 = vadd.f32 %v292, %v715
      %v717 = vpop.f32.mrf.mxu0
      %718 = vmatprep.mubr.bf16.mxu0 0
      %719 = vmatmul.mubr.bf16.gmra.mxu0 %v441
      %v720 = vpop.f32.mrf.mxu0
      %v721 = vadd.f32 %v292, %v720
      %v722 = vpop.f32.mrf.mxu0
      %v723 = vpop.f32.mrf.mxu0
      %v724 = vadd.f32 %v292, %v723
      %v725 = vpop.f32.mrf.mxu0
      %726 = vmatprep.mubr.bf16.mxu0 0
      %727 = vmatmul.mubr.bf16.gmra.mxu0 %v442
      %v728 = vpop.f32.mrf.mxu0
      %v729 = vadd.f32 %v292, %v728
      %v730 = vpop.f32.mrf.mxu0
      %v731 = vpop.f32.mrf.mxu0
      %v732 = vadd.f32 %v292, %v731
      %v733 = vpop.f32.mrf.mxu0
      %734 = vmatprep.mubr.bf16.mxu0 0
      %735 = vmatmul.mubr.bf16.gmra.mxu0 %v443
      %v736 = vpop.f32.mrf.mxu0
      %v737 = vadd.f32 %v292, %v736
      %v738 = vpop.f32.mrf.mxu0
      %v739 = vpop.f32.mrf.mxu0
      %v740 = vadd.f32 %v292, %v739
      %v741 = vpop.f32.mrf.mxu0
      %742 = vmatprep.mubr.bf16.mxu0 0
      %743 = vmatmul.mubr.bf16.gmra.mxu0 %v444
      %v744 = vpop.f32.mrf.mxu0
      %v745 = vadd.f32 %v292, %v744
      %v746 = vpop.f32.mrf.mxu0
      %v747 = vpop.f32.mrf.mxu0
      %v748 = vadd.f32 %v292, %v747
      %v749 = vpop.f32.mrf.mxu0
      %750 = vmatprep.mubr.bf16.mxu0 0
      %751 = vmatmul.mubr.bf16.gmra.mxu0 %v445
      %v752 = vpop.f32.mrf.mxu0
      %v753 = vadd.f32 %v292, %v752
      %v754 = vpop.f32.mrf.mxu0
      %v755 = vpop.f32.mrf.mxu0
      %v756 = vadd.f32 %v292, %v755
      %v757 = vpop.f32.mrf.mxu0
      %758 = vmatprep.mubr.bf16.mxu0 0
      %759 = vmatmul.mubr.bf16.gmra.mxu0 %v446
      %v760 = vpop.f32.mrf.mxu0
      %v761 = vadd.f32 %v292, %v760
      %v762 = vpop.f32.mrf.mxu0
      %v763 = vpop.f32.mrf.mxu0
      %v764 = vadd.f32 %v292, %v763
      %v765 = vpop.f32.mrf.mxu0
      %766 = vmatprep.mubr.bf16.mxu0 0
      %767 = vmatmul.mubr.bf16.gmra.mxu0 %v447
      %v768 = vpop.f32.mrf.mxu0
      %v769 = vadd.f32 %v292, %v768
      %v770 = vpop.f32.mrf.mxu0
      %v771 = vpop.f32.mrf.mxu0
      %v772 = vadd.f32 %v292, %v771
      %v773 = vpop.f32.mrf.mxu0
      %774 = vmatprep.mubr.bf16.mxu0 0
      %775 = vmatmul.mubr.bf16.gmra.mxu0 %v448
      %v776 = vpop.f32.mrf.mxu0
      %v777 = vadd.f32 %v292, %v776
      %v778 = vpop.f32.mrf.mxu0
      %v779 = vpop.f32.mrf.mxu0
      %v780 = vadd.f32 %v292, %v779
      %v781 = vpop.f32.mrf.mxu0
      %782 = vmatprep.mubr.bf16.mxu0 0
      %783 = vmatmul.mubr.bf16.gmra.mxu0 %v449
      %v784 = vpop.f32.mrf.mxu0
      %v785 = vadd.f32 %v292, %v784
      %v786 = vpop.f32.mrf.mxu0
      %v787 = vpop.f32.mrf.mxu0
      %v788 = vadd.f32 %v292, %v787
      %v789 = vpop.f32.mrf.mxu0
      %790 = vmatprep.mubr.bf16.mxu0 0
      %791 = vmatmul.mubr.bf16.gmra.mxu0 %v450
      %v792 = vpop.f32.mrf.mxu0
      %v793 = vadd.f32 %v292, %v792
      %v794 = vpop.f32.mrf.mxu0
      %v795 = vpop.f32.mrf.mxu0
      %v796 = vadd.f32 %v292, %v795
      %v797 = vpop.f32.mrf.mxu0
      %798 = vmatprep.mubr.bf16.mxu0 0
      %799 = vmatmul.mubr.bf16.gmra.mxu0 %v451
      %v800 = vpop.f32.mrf.mxu0
      %v801 = vadd.f32 %v292, %v800
      %v802 = vpop.f32.mrf.mxu0
      %v803 = vpop.f32.mrf.mxu0
      %v804 = vadd.f32 %v292, %v803
      %v805 = vpop.f32.mrf.mxu0
      %806 = vmatprep.mubr.bf16.mxu0 0
      %807 = vmatmul.mubr.bf16.gmra.mxu0 %v452
      %v808 = vpop.f32.mrf.mxu0
      %v809 = vadd.f32 %v292, %v808
      %v810 = vpop.f32.mrf.mxu0
      %v811 = vpop.f32.mrf.mxu0
      %v812 = vadd.f32 %v292, %v811
      %v813 = vpop.f32.mrf.mxu0
      %814 = vmatprep.mubr.bf16.mxu0 0
      %815 = vmatmul.mubr.bf16.gmra.mxu0 %v453
      %v816 = vpop.f32.mrf.mxu0
      %v817 = vadd.f32 %v292, %v816
      %v818 = vpop.f32.mrf.mxu0
      %v819 = vpop.f32.mrf.mxu0
      %v820 = vadd.f32 %v292, %v819
      %v821 = vpop.f32.mrf.mxu0
      %822 = vdwg.mxu0
      %v823 = vmax.f32 %v569, 0.0
      %v824 = vmax.f32 %v572, 0.0
      %v825 = vmax.f32 %v577, 0.0
      %v826 = vmax.f32 %v580, 0.0
      %v827 = vmax.f32 %v585, 0.0
      %v828 = vmax.f32 %v588, 0.0
      %v829 = vmax.f32 %v593, 0.0
      %v830 = vmax.f32 %v596, 0.0
      %v831 = vmax.f32 %v601, 0.0
      %v832 = vmax.f32 %v604, 0.0
      %v833 = vmax.f32 %v609, 0.0
      %v834 = vmax.f32 %v612, 0.0
      %v835 = vmax.f32 %v617, 0.0
      %v836 = vmax.f32 %v620, 0.0
      %v837 = vmax.f32 %v625, 0.0
      %v838 = vmax.f32 %v628, 0.0
      %v839 = vmax.f32 %v633, 0.0
      %v840 = vmax.f32 %v636, 0.0
      %v841 = vmax.f32 %v641, 0.0
      %v842 = vmax.f32 %v644, 0.0
      %v843 = vmax.f32 %v649, 0.0
      %v844 = vmax.f32 %v652, 0.0
      %v845 = vmax.f32 %v657, 0.0
      %v846 = vmax.f32 %v660, 0.0
      %v847 = vmax.f32 %v665, 0.0
      %v848 = vmax.f32 %v668, 0.0
      %v849 = vmax.f32 %v673, 0.0
      %v850 = vmax.f32 %v676, 0.0
      %v851 = vmax.f32 %v681, 0.0
      %v852 = vmax.f32 %v684, 0.0
      %v853 = vmax.f32 %v689, 0.0
      %v854 = vmax.f32 %v692, 0.0
      %v855 = vmax.f32 %v697, 0.0
      %v856 = vmax.f32 %v700, 0.0
      %v857 = vmax.f32 %v705, 0.0
      %v858 = vmax.f32 %v708, 0.0
      %v859 = vmax.f32 %v713, 0.0
      %v860 = vmax.f32 %v716, 0.0
      %v861 = vmax.f32 %v721, 0.0
      %v862 = vmax.f32 %v724, 0.0
      %v863 = vmax.f32 %v729, 0.0
      %v864 = vmax.f32 %v732, 0.0
      %v865 = vmax.f32 %v737, 0.0
      %v866 = vmax.f32 %v740, 0.0
      %v867 = vmax.f32 %v745, 0.0
      %v868 = vmax.f32 %v748, 0.0
      %v869 = vmax.f32 %v753, 0.0
      %v870 = vmax.f32 %v756, 0.0
      %v871 = vmax.f32 %v761, 0.0
      %v872 = vmax.f32 %v764, 0.0
      %v873 = vmax.f32 %v769, 0.0
      %v874 = vmax.f32 %v772, 0.0
      %v875 = vmax.f32 %v777, 0.0
      %v876 = vmax.f32 %v780, 0.0
      %v877 = vmax.f32 %v785, 0.0
      %v878 = vmax.f32 %v788, 0.0
      %v879 = vmax.f32 %v793, 0.0
      %v880 = vmax.f32 %v796, 0.0
      %v881 = vmax.f32 %v801, 0.0
      %v882 = vmax.f32 %v804, 0.0
      %v883 = vmax.f32 %v809, 0.0
      %v884 = vmax.f32 %v812, 0.0
      %v885 = vmax.f32 %v817, 0.0
      %v886 = vmax.f32 %v820, 0.0
      %v887 = vld [vmem:[%s3] sm:$0xff]
      %v888 = vld [vmem:[%s3 + $0x8] sm:$0xff]
      %v889 = vld [vmem:[%s3 + $0x10] sm:$0xff]
      %v890 = vld [vmem:[%s3 + $0x18] sm:$0xff]
      %v891 = vld [vmem:[%s3 + $0x20] sm:$0xff]
      %v892 = vld [vmem:[%s3 + $0x28] sm:$0xff]
      %v893 = vld [vmem:[%s3 + $0x30] sm:$0xff]
      %v894 = vld [vmem:[%s3 + $0x38] sm:$0xff]
      %v895 = vld [vmem:[%s3 + $0x40] sm:$0xff]
      %v896 = vld [vmem:[%s3 + $0x48] sm:$0xff]
      %v897 = vld [vmem:[%s3 + $0x50] sm:$0xff]
      %v898 = vld [vmem:[%s3 + $0x58] sm:$0xff]
      %v899 = vld [vmem:[%s3 + $0x60] sm:$0xff]
      %v900 = vld [vmem:[%s3 + $0x68] sm:$0xff]
      %901 = vmatprep.subr.mxu0 0.0
      %902 = vmatpush1.msra.mxu0 %v838
      %903 = vmatprep.subr.mxu0 0.0
      %904 = vmatpush1.msra.mxu0 %v837
      %905 = vmatprep.subr.mxu0 0.0
      %906 = vmatpush1.msra.mxu0 %v836
      %907 = vmatprep.subr.mxu0 0.0
      %908 = vmatpush1.msra.mxu0 %v835
      %909 = vmatprep.subr.mxu0 0.0
      %910 = vmatpush1.msra.mxu0 %v834
      %911 = vmatprep.subr.mxu0 0.0
      %912 = vmatpush1.msra.mxu0 %v833
      %913 = vmatprep.subr.mxu0 0.0
      %914 = vmatpush1.msra.mxu0 %v832
      %915 = vmatprep.subr.mxu0 0.0
      %916 = vmatpush1.msra.mxu0 %v831
      %917 = vmatprep.subr.mxu0 0.0
      %918 = vmatpush1.msra.mxu0 %v830
      %919 = vmatprep.subr.mxu0 0.0
      %920 = vmatpush1.msra.mxu0 %v829
      %921 = vmatprep.subr.mxu0 0.0
      %922 = vmatpush1.msra.mxu0 %v828
      %923 = vmatprep.subr.mxu0 0.0
      %924 = vmatpush1.msra.mxu0 %v827
      %925 = vmatprep.subr.mxu0 0.0
      %926 = vmatpush1.msra.mxu0 %v826
      %927 = vmatprep.subr.mxu0 0.0
      %928 = vmatpush1.msra.mxu0 %v825
      %929 = vmatprep.subr.mxu0 0.0
      %930 = vmatpush1.msra.mxu0 %v824
      %931 = vmatprep.subr.mxu0 0.0
      %932 = vmatpush1.msra.mxu0 %v823
      %933 = vmatprep.subr.mxu0 0.0
      %934 = vmatpush2.msra.mxu0 %v854
      %935 = vmatprep.subr.mxu0 0.0
      %936 = vmatpush2.msra.mxu0 %v853
      %937 = vmatprep.subr.mxu0 0.0
      %938 = vmatpush2.msra.mxu0 %v852
      %939 = vmatprep.subr.mxu0 0.0
      %940 = vmatpush2.msra.mxu0 %v851
      %941 = vmatprep.subr.mxu0 0.0
      %942 = vmatpush2.msra.mxu0 %v850
      %943 = vmatprep.subr.mxu0 0.0
      %944 = vmatpush2.msra.mxu0 %v849
      %945 = vmatprep.subr.mxu0 0.0
      %946 = vmatpush2.msra.mxu0 %v848
      %947 = vmatprep.subr.mxu0 0.0
      %948 = vmatpush2.msra.mxu0 %v847
      %949 = vmatprep.subr.mxu0 0.0
      %950 = vmatpush2.msra.mxu0 %v846
      %951 = vmatprep.subr.mxu0 0.0
      %952 = vmatpush2.msra.mxu0 %v845
      %953 = vmatprep.subr.mxu0 0.0
      %954 = vmatpush2.msra.mxu0 %v844
      %955 = vmatprep.subr.mxu0 0.0
      %956 = vmatpush2.msra.mxu0 %v843
      %957 = vmatprep.subr.mxu0 0.0
      %958 = vmatpush2.msra.mxu0 %v842
      %959 = vmatprep.subr.mxu0 0.0
      %960 = vmatpush2.msra.mxu0 %v841
      %961 = vmatprep.subr.mxu0 0.0
      %962 = vmatpush2.msra.mxu0 %v840
      %963 = vmatprep.subr.mxu0 0.0
      %964 = vmatpush2.msra.mxu0 %v839
      %965 = vmatprep.mubr.f32.mxu0 %v888
      %966 = vmatmul.mubr.f32.gmra.mxu0 %v887
      %v967 = vpop.f32.mrf.mxu0
      %v968 = vadd.f32 0.0, %v967
      %v969 = vpop.f32.mrf.mxu0
      %970 = vmatprep.mubr.f32.mxu0 %v890
      %971 = vmatmul.mubr.f32.gmra.mxu0 %v889
      %v972 = vpop.f32.mrf.mxu0
      %v973 = vadd.f32 0.0, %v972
      %v974 = vpop.f32.mrf.mxu0
      %975 = vmatprep.mubr.f32.mxu0 %v892
      %976 = vmatmul.mubr.f32.gmra.mxu0 %v891
      %v977 = vpop.f32.mrf.mxu0
      %v978 = vadd.f32 0.0, %v977
      %v979 = vpop.f32.mrf.mxu0
      %980 = vmatprep.mubr.f32.mxu0 %v894
      %981 = vmatmul.mubr.f32.gmra.mxu0 %v893
      %v982 = vpop.f32.mrf.mxu0
      %v983 = vadd.f32 0.0, %v982
      %v984 = vpop.f32.mrf.mxu0
      %985 = vmatprep.mubr.f32.mxu0 %v896
      %986 = vmatmul.mubr.f32.gmra.mxu0 %v895
      %v987 = vpop.f32.mrf.mxu0
      %v988 = vadd.f32 0.0, %v987
      %v989 = vpop.f32.mrf.mxu0
      %990 = vmatprep.mubr.f32.mxu0 %v898
      %991 = vmatmul.mubr.f32.gmra.mxu0 %v897
      %v992 = vpop.f32.mrf.mxu0
      %v993 = vadd.f32 0.0, %v992
      %v994 = vpop.f32.mrf.mxu0
      %995 = vmatprep.mubr.f32.mxu0 %v900
      %996 = vmatmul.mubr.f32.gmra.mxu0 %v899
      %v997 = vpop.f32.mrf.mxu0
      %v998 = vadd.f32 0.0, %v997
      %v999 = vpop.f32.mrf.mxu0
      %1000 = vdwg.mxu0
      %1001 = vst [vmem:[%s204] sm:$0xff] %v968
      %1002 = vst [vmem:[%s204 + $0x8] sm:$0xff] %v973
      %1003 = vst [vmem:[%s204 + $0x10] sm:$0xff] %v978
      %1004 = vst [vmem:[%s204 + $0x18] sm:$0xff] %v983
      %1005 = vst [vmem:[%s204 + $0x20] sm:$0xff] %v988
      %1006 = vst [vmem:[%s204 + $0x28] sm:$0xff] %v993
      %1007 = vst [vmem:[%s204 + $0x30] sm:$0xff] %v998
      %1008 = vmatprep.subr.mxu0 0.0
      %1009 = vmatpush1.msra.mxu0 %v870
      %1010 = vmatprep.subr.mxu0 0.0
      %1011 = vmatpush1.msra.mxu0 %v869
      %1012 = vmatprep.subr.mxu0 0.0
      %1013 = vmatpush1.msra.mxu0 %v868
      %1014 = vmatprep.subr.mxu0 0.0
      %1015 = vmatpush1.msra.mxu0 %v867
      %1016 = vmatprep.subr.mxu0 0.0
      %1017 = vmatpush1.msra.mxu0 %v866
      %1018 = vmatprep.subr.mxu0 0.0
      %1019 = vmatpush1.msra.mxu0 %v865
      %1020 = vmatprep.subr.mxu0 0.0
      %1021 = vmatpush1.msra.mxu0 %v864
      %1022 = vmatprep.subr.mxu0 0.0
      %1023 = vmatpush1.msra.mxu0 %v863
      %1024 = vmatprep.subr.mxu0 0.0
      %1025 = vmatpush1.msra.mxu0 %v862
      %1026 = vmatprep.subr.mxu0 0.0
      %1027 = vmatpush1.msra.mxu0 %v861
      %1028 = vmatprep.subr.mxu0 0.0
      %1029 = vmatpush1.msra.mxu0 %v860
      %1030 = vmatprep.subr.mxu0 0.0
      %1031 = vmatpush1.msra.mxu0 %v859
      %1032 = vmatprep.subr.mxu0 0.0
      %1033 = vmatpush1.msra.mxu0 %v858
      %1034 = vmatprep.subr.mxu0 0.0
      %1035 = vmatpush1.msra.mxu0 %v857
      %1036 = vmatprep.subr.mxu0 0.0
      %1037 = vmatpush1.msra.mxu0 %v856
      %1038 = vmatprep.subr.mxu0 0.0
      %1039 = vmatpush1.msra.mxu0 %v855
      %1040 = vmatprep.subr.mxu0 0.0
      %1041 = vmatpush2.msra.mxu0 %v886
      %1042 = vmatprep.subr.mxu0 0.0
      %1043 = vmatpush2.msra.mxu0 %v885
      %1044 = vmatprep.subr.mxu0 0.0
      %1045 = vmatpush2.msra.mxu0 %v884
      %1046 = vmatprep.subr.mxu0 0.0
      %1047 = vmatpush2.msra.mxu0 %v883
      %1048 = vmatprep.subr.mxu0 0.0
      %1049 = vmatpush2.msra.mxu0 %v882
      %1050 = vmatprep.subr.mxu0 0.0
      %1051 = vmatpush2.msra.mxu0 %v881
      %1052 = vmatprep.subr.mxu0 0.0
      %1053 = vmatpush2.msra.mxu0 %v880
      %1054 = vmatprep.subr.mxu0 0.0
      %1055 = vmatpush2.msra.mxu0 %v879
      %1056 = vmatprep.subr.mxu0 0.0
      %1057 = vmatpush2.msra.mxu0 %v878
      %1058 = vmatprep.subr.mxu0 0.0
      %1059 = vmatpush2.msra.mxu0 %v877
      %1060 = vmatprep.subr.mxu0 0.0
      %1061 = vmatpush2.msra.mxu0 %v876
      %1062 = vmatprep.subr.mxu0 0.0
      %1063 = vmatpush2.msra.mxu0 %v875
      %1064 = vmatprep.subr.mxu0 0.0
      %1065 = vmatpush2.msra.mxu0 %v874
      %1066 = vmatprep.subr.mxu0 0.0
      %1067 = vmatpush2.msra.mxu0 %v873
      %1068 = vmatprep.subr.mxu0 0.0
      %1069 = vmatpush2.msra.mxu0 %v872
      %1070 = vmatprep.subr.mxu0 0.0
      %1071 = vmatpush2.msra.mxu0 %v871
      %1072 = vmatprep.mubr.f32.mxu0 %v888
      %1073 = vmatmul.mubr.f32.gmra.mxu0 %v887
      %v1074 = vpop.f32.mrf.mxu0
      %v1075 = vadd.f32 0.0, %v1074
      %v1076 = vpop.f32.mrf.mxu0
      %1077 = vmatprep.mubr.f32.mxu0 %v890
      %1078 = vmatmul.mubr.f32.gmra.mxu0 %v889
      %v1079 = vpop.f32.mrf.mxu0
      %v1080 = vadd.f32 0.0, %v1079
      %v1081 = vpop.f32.mrf.mxu0
      %1082 = vmatprep.mubr.f32.mxu0 %v892
      %1083 = vmatmul.mubr.f32.gmra.mxu0 %v891
      %v1084 = vpop.f32.mrf.mxu0
      %v1085 = vadd.f32 0.0, %v1084
      %v1086 = vpop.f32.mrf.mxu0
      %1087 = vmatprep.mubr.f32.mxu0 %v894
      %1088 = vmatmul.mubr.f32.gmra.mxu0 %v893
      %v1089 = vpop.f32.mrf.mxu0
      %v1090 = vadd.f32 0.0, %v1089
      %v1091 = vpop.f32.mrf.mxu0
      %1092 = vmatprep.mubr.f32.mxu0 %v896
      %1093 = vmatmul.mubr.f32.gmra.mxu0 %v895
      %v1094 = vpop.f32.mrf.mxu0
      %v1095 = vadd.f32 0.0, %v1094
      %v1096 = vpop.f32.mrf.mxu0
      %1097 = vmatprep.mubr.f32.mxu0 %v898
      %1098 = vmatmul.mubr.f32.gmra.mxu0 %v897
      %v1099 = vpop.f32.mrf.mxu0
      %v1100 = vadd.f32 0.0, %v1099
      %v1101 = vpop.f32.mrf.mxu0
      %1102 = vmatprep.mubr.f32.mxu0 %v900
      %1103 = vmatmul.mubr.f32.gmra.mxu0 %v899
      %v1104 = vpop.f32.mrf.mxu0
      %v1105 = vadd.f32 0.0, %v1104
      %v1106 = vpop.f32.mrf.mxu0
      %1107 = vdwg.mxu0
      %s1108 = scalar_lea.vmem %s204, 56
      %1109 = vst [vmem:[%s1108] sm:$0xff] %v1075
      %1110 = vst [vmem:[%s1108 + $0x8] sm:$0xff] %v1080
      %1111 = vst [vmem:[%s1108 + $0x10] sm:$0xff] %v1085
      %1112 = vst [vmem:[%s1108 + $0x18] sm:$0xff] %v1090
      %1113 = vst [vmem:[%s1108 + $0x20] sm:$0xff] %v1095
      %1114 = vst [vmem:[%s1108 + $0x28] sm:$0xff] %v1100
      %1115 = vst [vmem:[%s1108 + $0x30] sm:$0xff] %v1105
      %s1116 = smul.u32 2, %s15
      %p1117 = scmp.lt.s32.totalorder %s1116, 3
      %s1118 = scalar_select %p1117, %s1116, 3
      %s1119 = smul.addr %s1118, 7
      %s1120 = smul.addr %s1119, 8
      %s1121 = scalar_lea.vmem %s4, %s1120
      // Predicated region
      $region37: #{encoder_forward.1} parent=35 // pred_check
        %p1122 = pneg %p122
      $region38: #{encoder_forward.1} parent=35 // pred_check_branch
        %1124 = sbr.rel (%p1122) target = $region40
      $region39: #{encoder_forward.1} parent=35 // pred_region
        %s1125 = smul.u32 2, %s15
      $region40: #{encoder_forward.1} parent=35 // pred_fallthru
        _
    $region36: #{encoder_forward.1} parent=5 // pred_fallthru
      _
    %p1126 = scmp.le.s32.totalorder 2, %s10
    // Predicated region
    $region41: #{encoder_forward.1} parent=5 // pred_check
      %p1127 = pneg %p1126
    $region42: #{encoder_forward.1} parent=5 // pred_check_branch
      %1129 = sbr.rel (%p1127) target = $region44
    $region43: #{encoder_forward.1} parent=5 // pred_region
      %s1130 = ssub.s32 %s10, 2
      // Predicated region
      $region45: #{encoder_forward.1} parent=43 // pred_check
        %p1131 = pneg %p128
      $region46: #{encoder_forward.1} parent=43 // pred_check_branch
        %1133 = sbr.rel (%p1131) target = $region48
      $region47: #{encoder_forward.1} parent=43 // pred_region
        %s1134 = smul.u32 2, %s16
        %p1135 = scmp.lt.s32.totalorder %s1134, 3
        %s1136 = scalar_select %p1135, %s1134, 3
        %s1137 = smul.addr %s1136, 7
        %s1138 = smul.addr %s1137, 8
        %s1139 = scalar_lea.vmem %s4, %s1138
      $region48: #{encoder_forward.1} parent=43 // pred_fallthru
        _
    $region44: #{encoder_forward.1} parent=5 // pred_fallthru
      _
  $region6: #{encoder_forward.1} parent=0 // loop_footer
    %s14 = sadd.s32 1, %s10
  $region7: #{encoder_forward.1} parent=0 // loop_footer_branch
    %9 = sbr.rel target = $region3
  $region8: #{encoder_forward.1} parent=0 // loop_exit
    _

</llo_original>
